<compile_context>
chip_gen: v7x
topology: tpu7x:2x2x1
jax: 0.10.0
libtpu: 0.0.40
codegen_flags: <defaults>
</compile_context>

<pallas_src>
import functools

import numpy as np
import jax
import jax.numpy as jnp
from jax.experimental import pallas as pl
from jax.experimental.pallas import tpu as pltpu

_LANES = 128
_SUB = 8


# ----------------------------- Pallas kernel ------------------------------

def _yolo_loss_kernel(pred_ref, tgt_ref, out_ref, *,
                      lamda_coord, lamda_noob, inv_batch):
    """pred_ref / tgt_ref: (30, rows, 128) channel-major tiles.

    Emits one lane-dense (1, 8, 128) partial: the per-lane weighted loss
    summed over this grid step's rows (1/batch already folded in).
    """
    rows = pred_ref.shape[1]
    n_chunks = rows // _SUB

    def chunk_body(ci, acc):
        r0 = pl.multiple_of(ci * _SUB, _SUB)

        def pch(c):                      # one pred channel slab, (8, 128)
            return pred_ref[c, pl.ds(r0, _SUB), :].astype(jnp.float32)

        def tch(c):                      # one target channel slab, (8, 128)
            return tgt_ref[c, pl.ds(r0, _SUB), :].astype(jnp.float32)

        tc = tch(4)                      # target confidence
        has_obj = tc > 0.0
        obj = has_obj.astype(jnp.float32)
        noobj = (tc == 0.0).astype(jnp.float32)

        p0x, p0y, p0w, p0h, p0c = pch(0), pch(1), pch(2), pch(3), pch(4)
        p1x, p1y, p1w, p1h, p1c = pch(5), pch(6), pch(7), pch(8), pch(9)
        t0x, t0y, t0w, t0h = tch(0), tch(1), tch(2), tch(3)
        t1x, t1y, t1w, t1h = tch(5), tch(6), tch(7), tch(8)
        t1c = tch(9)

        def iou(px, py, pw, ph, tx, ty, tw, th):
            # Reproduces YoloLoss.IOU exactly (including inverted-overlap mask).
            x_left = jnp.maximum(px - 0.5 * pw, tx - 0.5 * tw)
            y_top = jnp.maximum(py - 0.5 * ph, ty - 0.5 * th)
            x_right = jnp.minimum(px + 0.5 * pw, tx + 0.5 * tw)
            y_bottom = jnp.minimum(py + 0.5 * ph, ty + 0.5 * th)
            mask = ((x_right < x_left) | (y_bottom < y_top)).astype(jnp.float32)
            inter = mask * (x_right - x_left) * (y_bottom - y_top)
            return inter / (pw * ph + tw * th - inter)

        iou0 = iou(p0x, p0y, p0w, p0h, t0x, t0y, t0w, t0h)
        iou1 = iou(p1x, p1y, p1w, p1h, t1x, t1y, t1w, t1h)
        # torch loop picks box 0 iff iou0 > iou1 (strict), else box 1.
        choose0 = iou0 > iou1

        cx = jnp.where(choose0, p0x, p1x)
        cy = jnp.where(choose0, p0y, p1y)
        cw = jnp.where(choose0, p0w, p1w)
        chh = jnp.where(choose0, p0h, p1h)
        cc = jnp.where(choose0, p0c, p1c)

        # xy loss (object cells only; masked by obj below).
        xy_term = (cx - t0x) ** 2 + (cy - t0y) ** 2

        # wh loss with sqrt; guard no-object / padded lanes so 0*NaN can't leak.
        sw_p = jnp.sqrt(jnp.where(has_obj, cw, 1.0))
        sh_p = jnp.sqrt(jnp.where(has_obj, chh, 1.0))
        sw_t = jnp.sqrt(jnp.where(has_obj, t0w, 1.0))
        sh_t = jnp.sqrt(jnp.where(has_obj, t0h, 1.0))
        wh_term = (sw_p - sw_t) ** 2 + (sh_p - sh_t) ** 2

        # confidence losses.
        conf_obj = (cc - tc) ** 2
        conf_noobj = (p0c - tc) ** 2 + (p1c - t1c) ** 2

        # class loss: unrolled per-channel accumulation (keeps live vregs low).
        class_term = jnp.zeros((_SUB, _LANES), jnp.float32)
        for c in range(10, 30):
            d = pch(c) - tch(c)
            class_term = class_term + d * d

        per_lane = (obj * (lamda_coord * (xy_term + wh_term)
                           + conf_obj + class_term)
                    + (lamda_noob * noobj) * conf_noobj)
        return acc + per_lane

    acc = jax.lax.fori_loop(0, n_chunks, chunk_body,
                            jnp.zeros((_SUB, _LANES), jnp.float32))
    out_ref[0] = acc * inv_batch          # unmasked lane-dense (8,128) store


# ------------------------------- wrapper -----------------------------------

def yolo_loss_pallas(pred, target, lamda_coord=5.0, lamda_noob=0.5,
                     rows_per_step=128):
    """pred/target: (batch, S, S, 30).  Returns scalar total_loss / batch.

    rows_per_step: 128-cell lane-rows per grid step (multiple of 8).  The
    default 128 moves ~1.9 MiB per input per step (~7.5 MiB double-buffered),
    within the default scoped-VMEM limits of v5e/v6e/v7x.
    """
    assert rows_per_step % _SUB == 0
    batch = pred.shape[0]
    c = pred.shape[-1]                     # 30 (B*5 + C)
    n = int(np.prod(pred.shape[:-1]))      # batch * S * S cells

    nb = -(-n // _LANES)                   # 128-lane rows needed
    nb = -(-nb // _SUB) * _SUB             # round up to a sublane multiple
    if nb <= rows_per_step:
        rows = nb                          # small problem: single grid step
    else:
        rows = rows_per_step
        nb = -(-nb // rows) * rows
    num_steps = nb // rows
    n_pad = nb * _LANES

    # Layout plumbing: cells -> (row, lane), channels -> leading axis so every
    # in-kernel channel slice is a full (8,128) vreg slab.
    # TODO(synk): have the producer emit channel-major (30, N) activations so
    # this single transpose pass over HBM disappears entirely.
    p = pred.reshape(n, c)
    t = target.reshape(n, c)
    if n_pad != n:
        # Zero padding is inert: padded lanes have target conf == 0 and
        # pred == target == 0; the sqrt path is guarded in-kernel.
        p = jnp.pad(p, ((0, n_pad - n), (0, 0)))
        t = jnp.pad(t, ((0, n_pad - n), (0, 0)))
    p = p.T.reshape(c, nb, _LANES)
    t = t.T.reshape(c, nb, _LANES)

    kernel = functools.partial(
        _yolo_loss_kernel,
        lamda_coord=float(lamda_coord),
        lamda_noob=float(lamda_noob),
        inv_batch=1.0 / float(batch))

    partials = pl.pallas_call(
        kernel,
        out_shape=jax.ShapeDtypeStruct((num_steps, _SUB, _LANES), jnp.float32),
        grid_spec=pltpu.PrefetchScalarGridSpec(
            num_scalar_prefetch=0,
            grid=(num_steps,),
            in_specs=[pl.BlockSpec((c, rows, _LANES), lambda i: (0, i, 0)),
                      pl.BlockSpec((c, rows, _LANES), lambda i: (0, i, 0))],
            out_specs=pl.BlockSpec((1, _SUB, _LANES), lambda i: (i, 0, 0))),
        compiler_params=pltpu.CompilerParams(
            # Tiles are independent -> can shard across v7x's two TensorCores.
            dimension_semantics=("parallel",),
            vmem_limit_bytes=32 * 1024 * 1024),
    )(p, t)

    # Tiny final reduction over the lane-dense per-step partials.
    return jnp.sum(partials)


# --------------------------- numpy reference ------------------------------

def _iou_np(b1, b2):
    x1, y1, w1, h1 = b1[:, 0:1], b1[:, 1:2], b1[:, 2:3], b1[:, 3:4]
    x2, y2, w2, h2 = b2[:, 0:1], b2[:, 1:2], b2[:, 2:3], b2[:, 3:4]
    x_left = np.maximum(x1 - w1 / 2, x2 - w2 / 2)
    y_top = np.maximum(y1 - h1 / 2, y2 - h2 / 2)
    x_right = np.minimum(x1 + w1 / 2, x2 + w2 / 2)
    y_bottom = np.minimum(y1 + h1 / 2, y2 + h2 / 2)
    mask = ((x_right < x_left) | (y_bottom < y_top)).astype(x_left.dtype)
    inter = mask * (x_right - x_left) * (y_bottom - y_top)
    return inter / (w1 * h1 + w2 * h2 - inter)


def yolo_loss_reference(pred, target, lamda_coord=5.0, lamda_noob=0.5):
    pred = np.asarray(pred, np.float32)
    target = np.asarray(target, np.float32)
    batch = pred.shape[0]
    p = pred.reshape(-1, 30)
    t = target.reshape(-1, 30)
    obj = t[:, 4] > 0
    noobj = t[:, 4] == 0
    po, to = p[obj], t[obj]
    pn, tn = p[noobj], t[noobj]
    pb = po[:, :10].reshape(-1, 5)
    tb = to[:, :10].reshape(-1, 5)
    ious = _iou_np(pb, tb).reshape(-1, 2)
    choose0 = ious[:, 0] > ious[:, 1]
    chosen = np.where(choose0[:, None], po[:, :5], po[:, 5:10])
    tbi = to[:, :5]
    xy = np.sum((chosen[:, :2] - tbi[:, :2]) ** 2)
    wh = np.sum((np.sqrt(chosen[:, 2:4]) - np.sqrt(tbi[:, 2:4])) ** 2)
    co = np.sum((chosen[:, 4] - tbi[:, 4]) ** 2)
    cn = np.sum((pn[:, [4, 9]] - tn[:, [4, 9]]) ** 2)
    cl = np.sum((po[:, 10:] - to[:, 10:]) ** 2)
    total = lamda_coord * xy + lamda_coord * wh + co + lamda_noob * cn + cl
    return total / batch


# --------------------------------- main ------------------------------------

if __name__ == "__main__":
    def make_inputs(key, batch, S):
        k1, k2, k3 = jax.random.split(key, 3)
        # targets: boxes/classes in (0.1, 0.9); confidences at cols 4 and 9
        # exactly 1.0 for object cells and exactly 0.0 for no-object cells.
        target = jax.random.uniform(k1, (batch, S, S, 30),
                                    minval=0.1, maxval=0.9, dtype=jnp.float32)
        obj_mask = (jax.random.uniform(k2, (batch, S, S)) > 0.5
                    ).astype(jnp.float32)
        target = target.at[..., 4].set(obj_mask)
        target = target.at[..., 9].set(obj_mask)
        # predictions: strictly positive w/h so sqrt is well-defined.
        pred = jax.random.uniform(k3, (batch, S, S, 30),
                                  minval=0.1, maxval=0.9, dtype=jnp.float32)
        return pred, target

    key = jax.random.PRNGKey(0)
    k_a, k_b = jax.random.split(key)

    # Small case (batch=2, S=4): single grid step, exercises tail padding.
    pred, target = make_inputs(k_a, batch=2, S=4)
    loss = jax.block_until_ready(jax.jit(yolo_loss_pallas)(pred, target))
    ref = yolo_loss_reference(pred, target)
    np.testing.assert_allclose(np.asarray(loss), ref, rtol=2e-4, atol=2e-4)

    # Larger case (batch=8, S=16) with tiny rows_per_step to exercise the
    # multi-step grid / per-step partial path.
    pred2, target2 = make_inputs(k_b, batch=8, S=16)
    loss2 = jax.block_until_ready(
        jax.jit(functools.partial(yolo_loss_pallas, rows_per_step=8))(
            pred2, target2))
    ref2 = yolo_loss_reference(pred2, target2)
    np.testing.assert_allclose(np.asarray(loss2), ref2, rtol=2e-4, atol=2e-4)

    print("KERNEL_OK")
</pallas_src>

<mosaic_0001>
module attributes {stable_mosaic.version = 11 : i64} {
  func.func @_yolo_loss_kernel(%arg0: i32, %arg1: memref<30x8x128xf32, #tpu.memory_space<vmem>>, %arg2: memref<30x8x128xf32, #tpu.memory_space<vmem>>, %arg3: memref<1x8x128xf32, #tpu.memory_space<vmem>>) attributes {dimension_semantics = [#tpu.dimension_semantics<parallel>], iteration_bounds = array<i64: 1>, scalar_prefetch = 0 : i64, scratch_operands = 0 : i64, tpu.core_type = #tpu.core_type<tc>, window_params = [{transform_indices = @transform_0, window_bounds = array<i64: 30, 8, 128>}, {transform_indices = @transform_1, window_bounds = array<i64: 30, 8, 128>}, {transform_indices = @transform_2, window_bounds = array<i64: 1, 8, 128>}]} {
    %cst = arith.constant 0.000000e+00 : f32
    %0 = vector.broadcast %cst : f32 to vector<8x128xf32>
    %c0_i32 = arith.constant 0 : i32
    %c8_i32 = arith.constant 8 : i32
    %1 = arith.muli %c0_i32, %c8_i32 : i32
    %2 = tpu.assume_multiple %1, 8 : i32
    %c4 = arith.constant 4 : index
    %3 = arith.index_cast %2 : i32 to index
    %c0 = arith.constant 0 : index
    %4 = vector.load %arg2[%c4, %3, %c0] : memref<30x8x128xf32, #tpu.memory_space<vmem>>, vector<1x8x128xf32>
    %5 = vector.shape_cast %4 : vector<1x8x128xf32> to vector<8x128xf32>
    %cst_0 = arith.constant 0.000000e+00 : f32
    %6 = vector.broadcast %cst_0 : f32 to vector<8x128xf32>
    %7 = arith.cmpf ogt, %5, %6 : vector<8x128xf32>
    %8 = arith.extui %7 : vector<8x128xi1> to vector<8x128xi32>
    %9 = arith.sitofp %8 : vector<8x128xi32> to vector<8x128xf32>
    %cst_1 = arith.constant 0.000000e+00 : f32
    %10 = vector.broadcast %cst_1 : f32 to vector<8x128xf32>
    %11 = arith.cmpf oeq, %5, %10 : vector<8x128xf32>
    %12 = arith.extui %11 : vector<8x128xi1> to vector<8x128xi32>
    %13 = arith.sitofp %12 : vector<8x128xi32> to vector<8x128xf32>
    %c0_2 = arith.constant 0 : index
    %14 = arith.index_cast %2 : i32 to index
    %c0_3 = arith.constant 0 : index
    %15 = vector.load %arg1[%c0_2, %14, %c0_3] : memref<30x8x128xf32, #tpu.memory_space<vmem>>, vector<1x8x128xf32>
    %16 = vector.shape_cast %15 : vector<1x8x128xf32> to vector<8x128xf32>
    %c1 = arith.constant 1 : index
    %17 = arith.index_cast %2 : i32 to index
    %c0_4 = arith.constant 0 : index
    %18 = vector.load %arg1[%c1, %17, %c0_4] : memref<30x8x128xf32, #tpu.memory_space<vmem>>, vector<1x8x128xf32>
    %19 = vector.shape_cast %18 : vector<1x8x128xf32> to vector<8x128xf32>
    %c2 = arith.constant 2 : index
    %20 = arith.index_cast %2 : i32 to index
    %c0_5 = arith.constant 0 : index
    %21 = vector.load %arg1[%c2, %20, %c0_5] : memref<30x8x128xf32, #tpu.memory_space<vmem>>, vector<1x8x128xf32>
    %22 = vector.shape_cast %21 : vector<1x8x128xf32> to vector<8x128xf32>
    %c3 = arith.constant 3 : index
    %23 = arith.index_cast %2 : i32 to index
    %c0_6 = arith.constant 0 : index
    %24 = vector.load %arg1[%c3, %23, %c0_6] : memref<30x8x128xf32, #tpu.memory_space<vmem>>, vector<1x8x128xf32>
    %25 = vector.shape_cast %24 : vector<1x8x128xf32> to vector<8x128xf32>
    %c4_7 = arith.constant 4 : index
    %26 = arith.index_cast %2 : i32 to index
    %c0_8 = arith.constant 0 : index
    %27 = vector.load %arg1[%c4_7, %26, %c0_8] : memref<30x8x128xf32, #tpu.memory_space<vmem>>, vector<1x8x128xf32>
    %28 = vector.shape_cast %27 : vector<1x8x128xf32> to vector<8x128xf32>
    %c5 = arith.constant 5 : index
    %29 = arith.index_cast %2 : i32 to index
    %c0_9 = arith.constant 0 : index
    %30 = vector.load %arg1[%c5, %29, %c0_9] : memref<30x8x128xf32, #tpu.memory_space<vmem>>, vector<1x8x128xf32>
    %31 = vector.shape_cast %30 : vector<1x8x128xf32> to vector<8x128xf32>
    %c6 = arith.constant 6 : index
    %32 = arith.index_cast %2 : i32 to index
    %c0_10 = arith.constant 0 : index
    %33 = vector.load %arg1[%c6, %32, %c0_10] : memref<30x8x128xf32, #tpu.memory_space<vmem>>, vector<1x8x128xf32>
    %34 = vector.shape_cast %33 : vector<1x8x128xf32> to vector<8x128xf32>
    %c7 = arith.constant 7 : index
    %35 = arith.index_cast %2 : i32 to index
    %c0_11 = arith.constant 0 : index
    %36 = vector.load %arg1[%c7, %35, %c0_11] : memref<30x8x128xf32, #tpu.memory_space<vmem>>, vector<1x8x128xf32>
    %37 = vector.shape_cast %36 : vector<1x8x128xf32> to vector<8x128xf32>
    %c8 = arith.constant 8 : index
    %38 = arith.index_cast %2 : i32 to index
    %c0_12 = arith.constant 0 : index
    %39 = vector.load %arg1[%c8, %38, %c0_12] : memref<30x8x128xf32, #tpu.memory_space<vmem>>, vector<1x8x128xf32>
    %40 = vector.shape_cast %39 : vector<1x8x128xf32> to vector<8x128xf32>
    %c9 = arith.constant 9 : index
    %41 = arith.index_cast %2 : i32 to index
    %c0_13 = arith.constant 0 : index
    %42 = vector.load %arg1[%c9, %41, %c0_13] : memref<30x8x128xf32, #tpu.memory_space<vmem>>, vector<1x8x128xf32>
    %43 = vector.shape_cast %42 : vector<1x8x128xf32> to vector<8x128xf32>
    %c0_14 = arith.constant 0 : index
    %44 = arith.index_cast %2 : i32 to index
    %c0_15 = arith.constant 0 : index
    %45 = vector.load %arg2[%c0_14, %44, %c0_15] : memref<30x8x128xf32, #tpu.memory_space<vmem>>, vector<1x8x128xf32>
    %46 = vector.shape_cast %45 : vector<1x8x128xf32> to vector<8x128xf32>
    %c1_16 = arith.constant 1 : index
    %47 = arith.index_cast %2 : i32 to index
    %c0_17 = arith.constant 0 : index
    %48 = vector.load %arg2[%c1_16, %47, %c0_17] : memref<30x8x128xf32, #tpu.memory_space<vmem>>, vector<1x8x128xf32>
    %49 = vector.shape_cast %48 : vector<1x8x128xf32> to vector<8x128xf32>
    %c2_18 = arith.constant 2 : index
    %50 = arith.index_cast %2 : i32 to index
    %c0_19 = arith.constant 0 : index
    %51 = vector.load %arg2[%c2_18, %50, %c0_19] : memref<30x8x128xf32, #tpu.memory_space<vmem>>, vector<1x8x128xf32>
    %52 = vector.shape_cast %51 : vector<1x8x128xf32> to vector<8x128xf32>
    %c3_20 = arith.constant 3 : index
    %53 = arith.index_cast %2 : i32 to index
    %c0_21 = arith.constant 0 : index
    %54 = vector.load %arg2[%c3_20, %53, %c0_21] : memref<30x8x128xf32, #tpu.memory_space<vmem>>, vector<1x8x128xf32>
    %55 = vector.shape_cast %54 : vector<1x8x128xf32> to vector<8x128xf32>
    %c5_22 = arith.constant 5 : index
    %56 = arith.index_cast %2 : i32 to index
    %c0_23 = arith.constant 0 : index
    %57 = vector.load %arg2[%c5_22, %56, %c0_23] : memref<30x8x128xf32, #tpu.memory_space<vmem>>, vector<1x8x128xf32>
    %58 = vector.shape_cast %57 : vector<1x8x128xf32> to vector<8x128xf32>
    %c6_24 = arith.constant 6 : index
    %59 = arith.index_cast %2 : i32 to index
    %c0_25 = arith.constant 0 : index
    %60 = vector.load %arg2[%c6_24, %59, %c0_25] : memref<30x8x128xf32, #tpu.memory_space<vmem>>, vector<1x8x128xf32>
    %61 = vector.shape_cast %60 : vector<1x8x128xf32> to vector<8x128xf32>
    %c7_26 = arith.constant 7 : index
    %62 = arith.index_cast %2 : i32 to index
    %c0_27 = arith.constant 0 : index
    %63 = vector.load %arg2[%c7_26, %62, %c0_27] : memref<30x8x128xf32, #tpu.memory_space<vmem>>, vector<1x8x128xf32>
    %64 = vector.shape_cast %63 : vector<1x8x128xf32> to vector<8x128xf32>
    %c8_28 = arith.constant 8 : index
    %65 = arith.index_cast %2 : i32 to index
    %c0_29 = arith.constant 0 : index
    %66 = vector.load %arg2[%c8_28, %65, %c0_29] : memref<30x8x128xf32, #tpu.memory_space<vmem>>, vector<1x8x128xf32>
    %67 = vector.shape_cast %66 : vector<1x8x128xf32> to vector<8x128xf32>
    %c9_30 = arith.constant 9 : index
    %68 = arith.index_cast %2 : i32 to index
    %c0_31 = arith.constant 0 : index
    %69 = vector.load %arg2[%c9_30, %68, %c0_31] : memref<30x8x128xf32, #tpu.memory_space<vmem>>, vector<1x8x128xf32>
    %70 = vector.shape_cast %69 : vector<1x8x128xf32> to vector<8x128xf32>
    %cst_32 = arith.constant 5.000000e-01 : f32
    %71 = vector.broadcast %cst_32 : f32 to vector<8x128xf32>
    %72 = arith.mulf %71, %22 : vector<8x128xf32>
    %73 = arith.subf %16, %72 : vector<8x128xf32>
    %cst_33 = arith.constant 5.000000e-01 : f32
    %74 = vector.broadcast %cst_33 : f32 to vector<8x128xf32>
    %75 = arith.mulf %74, %52 : vector<8x128xf32>
    %76 = arith.subf %46, %75 : vector<8x128xf32>
    %77 = arith.maximumf %73, %76 : vector<8x128xf32>
    %cst_34 = arith.constant 5.000000e-01 : f32
    %78 = vector.broadcast %cst_34 : f32 to vector<8x128xf32>
    %79 = arith.mulf %78, %25 : vector<8x128xf32>
    %80 = arith.subf %19, %79 : vector<8x128xf32>
    %cst_35 = arith.constant 5.000000e-01 : f32
    %81 = vector.broadcast %cst_35 : f32 to vector<8x128xf32>
    %82 = arith.mulf %81, %55 : vector<8x128xf32>
    %83 = arith.subf %49, %82 : vector<8x128xf32>
    %84 = arith.maximumf %80, %83 : vector<8x128xf32>
    %cst_36 = arith.constant 5.000000e-01 : f32
    %85 = vector.broadcast %cst_36 : f32 to vector<8x128xf32>
    %86 = arith.mulf %85, %22 : vector<8x128xf32>
    %87 = arith.addf %16, %86 : vector<8x128xf32>
    %cst_37 = arith.constant 5.000000e-01 : f32
    %88 = vector.broadcast %cst_37 : f32 to vector<8x128xf32>
    %89 = arith.mulf %88, %52 : vector<8x128xf32>
    %90 = arith.addf %46, %89 : vector<8x128xf32>
    %91 = arith.minimumf %87, %90 : vector<8x128xf32>
    %cst_38 = arith.constant 5.000000e-01 : f32
    %92 = vector.broadcast %cst_38 : f32 to vector<8x128xf32>
    %93 = arith.mulf %92, %25 : vector<8x128xf32>
    %94 = arith.addf %19, %93 : vector<8x128xf32>
    %cst_39 = arith.constant 5.000000e-01 : f32
    %95 = vector.broadcast %cst_39 : f32 to vector<8x128xf32>
    %96 = arith.mulf %95, %55 : vector<8x128xf32>
    %97 = arith.addf %49, %96 : vector<8x128xf32>
    %98 = arith.minimumf %94, %97 : vector<8x128xf32>
    %99 = arith.cmpf olt, %91, %77 : vector<8x128xf32>
    %100 = arith.cmpf olt, %98, %84 : vector<8x128xf32>
    %101 = arith.ori %99, %100 : vector<8x128xi1>
    %102 = arith.extui %101 : vector<8x128xi1> to vector<8x128xi32>
    %103 = arith.sitofp %102 : vector<8x128xi32> to vector<8x128xf32>
    %104 = arith.subf %91, %77 : vector<8x128xf32>
    %105 = arith.mulf %103, %104 : vector<8x128xf32>
    %106 = arith.subf %98, %84 : vector<8x128xf32>
    %107 = arith.mulf %105, %106 : vector<8x128xf32>
    %108 = arith.mulf %22, %25 : vector<8x128xf32>
    %109 = arith.mulf %52, %55 : vector<8x128xf32>
    %110 = arith.addf %108, %109 : vector<8x128xf32>
    %111 = arith.subf %110, %107 : vector<8x128xf32>
    %112 = arith.divf %107, %111 : vector<8x128xf32>
    %cst_40 = arith.constant 5.000000e-01 : f32
    %113 = vector.broadcast %cst_40 : f32 to vector<8x128xf32>
    %114 = arith.mulf %113, %37 : vector<8x128xf32>
    %115 = arith.subf %31, %114 : vector<8x128xf32>
    %cst_41 = arith.constant 5.000000e-01 : f32
    %116 = vector.broadcast %cst_41 : f32 to vector<8x128xf32>
    %117 = arith.mulf %116, %64 : vector<8x128xf32>
    %118 = arith.subf %58, %117 : vector<8x128xf32>
    %119 = arith.maximumf %115, %118 : vector<8x128xf32>
    %cst_42 = arith.constant 5.000000e-01 : f32
    %120 = vector.broadcast %cst_42 : f32 to vector<8x128xf32>
    %121 = arith.mulf %120, %40 : vector<8x128xf32>
    %122 = arith.subf %34, %121 : vector<8x128xf32>
    %cst_43 = arith.constant 5.000000e-01 : f32
    %123 = vector.broadcast %cst_43 : f32 to vector<8x128xf32>
    %124 = arith.mulf %123, %67 : vector<8x128xf32>
    %125 = arith.subf %61, %124 : vector<8x128xf32>
    %126 = arith.maximumf %122, %125 : vector<8x128xf32>
    %cst_44 = arith.constant 5.000000e-01 : f32
    %127 = vector.broadcast %cst_44 : f32 to vector<8x128xf32>
    %128 = arith.mulf %127, %37 : vector<8x128xf32>
    %129 = arith.addf %31, %128 : vector<8x128xf32>
    %cst_45 = arith.constant 5.000000e-01 : f32
    %130 = vector.broadcast %cst_45 : f32 to vector<8x128xf32>
    %131 = arith.mulf %130, %64 : vector<8x128xf32>
    %132 = arith.addf %58, %131 : vector<8x128xf32>
    %133 = arith.minimumf %129, %132 : vector<8x128xf32>
    %cst_46 = arith.constant 5.000000e-01 : f32
    %134 = vector.broadcast %cst_46 : f32 to vector<8x128xf32>
    %135 = arith.mulf %134, %40 : vector<8x128xf32>
    %136 = arith.addf %34, %135 : vector<8x128xf32>
    %cst_47 = arith.constant 5.000000e-01 : f32
    %137 = vector.broadcast %cst_47 : f32 to vector<8x128xf32>
    %138 = arith.mulf %137, %67 : vector<8x128xf32>
    %139 = arith.addf %61, %138 : vector<8x128xf32>
    %140 = arith.minimumf %136, %139 : vector<8x128xf32>
    %141 = arith.cmpf olt, %133, %119 : vector<8x128xf32>
    %142 = arith.cmpf olt, %140, %126 : vector<8x128xf32>
    %143 = arith.ori %141, %142 : vector<8x128xi1>
    %144 = arith.extui %143 : vector<8x128xi1> to vector<8x128xi32>
    %145 = arith.sitofp %144 : vector<8x128xi32> to vector<8x128xf32>
    %146 = arith.subf %133, %119 : vector<8x128xf32>
    %147 = arith.mulf %145, %146 : vector<8x128xf32>
    %148 = arith.subf %140, %126 : vector<8x128xf32>
    %149 = arith.mulf %147, %148 : vector<8x128xf32>
    %150 = arith.mulf %37, %40 : vector<8x128xf32>
    %151 = arith.mulf %64, %67 : vector<8x128xf32>
    %152 = arith.addf %150, %151 : vector<8x128xf32>
    %153 = arith.subf %152, %149 : vector<8x128xf32>
    %154 = arith.divf %149, %153 : vector<8x128xf32>
    %155 = arith.cmpf ogt, %112, %154 : vector<8x128xf32>
    %156 = arith.select %155, %16, %31 : vector<8x128xi1>, vector<8x128xf32>
    %157 = arith.select %155, %19, %34 : vector<8x128xi1>, vector<8x128xf32>
    %158 = arith.select %155, %22, %37 : vector<8x128xi1>, vector<8x128xf32>
    %159 = arith.select %155, %25, %40 : vector<8x128xi1>, vector<8x128xf32>
    %160 = arith.select %155, %28, %43 : vector<8x128xi1>, vector<8x128xf32>
    %161 = arith.subf %156, %46 : vector<8x128xf32>
    %162 = arith.mulf %161, %161 : vector<8x128xf32>
    %163 = arith.subf %157, %49 : vector<8x128xf32>
    %164 = arith.mulf %163, %163 : vector<8x128xf32>
    %165 = arith.addf %162, %164 : vector<8x128xf32>
    %cst_48 = arith.constant 1.000000e+00 : f32
    %166 = vector.broadcast %cst_48 : f32 to vector<8x128xf32>
    %167 = arith.select %7, %158, %166 : vector<8x128xi1>, vector<8x128xf32>
    %168 = math.sqrt %167 : vector<8x128xf32>
    %cst_49 = arith.constant 1.000000e+00 : f32
    %169 = vector.broadcast %cst_49 : f32 to vector<8x128xf32>
    %170 = arith.select %7, %159, %169 : vector<8x128xi1>, vector<8x128xf32>
    %171 = math.sqrt %170 : vector<8x128xf32>
    %cst_50 = arith.constant 1.000000e+00 : f32
    %172 = vector.broadcast %cst_50 : f32 to vector<8x128xf32>
    %173 = arith.select %7, %52, %172 : vector<8x128xi1>, vector<8x128xf32>
    %174 = math.sqrt %173 : vector<8x128xf32>
    %cst_51 = arith.constant 1.000000e+00 : f32
    %175 = vector.broadcast %cst_51 : f32 to vector<8x128xf32>
    %176 = arith.select %7, %55, %175 : vector<8x128xi1>, vector<8x128xf32>
    %177 = math.sqrt %176 : vector<8x128xf32>
    %178 = arith.subf %168, %174 : vector<8x128xf32>
    %179 = arith.mulf %178, %178 : vector<8x128xf32>
    %180 = arith.subf %171, %177 : vector<8x128xf32>
    %181 = arith.mulf %180, %180 : vector<8x128xf32>
    %182 = arith.addf %179, %181 : vector<8x128xf32>
    %183 = arith.subf %160, %5 : vector<8x128xf32>
    %184 = arith.mulf %183, %183 : vector<8x128xf32>
    %185 = arith.subf %28, %5 : vector<8x128xf32>
    %186 = arith.mulf %185, %185 : vector<8x128xf32>
    %187 = arith.subf %43, %70 : vector<8x128xf32>
    %188 = arith.mulf %187, %187 : vector<8x128xf32>
    %189 = arith.addf %186, %188 : vector<8x128xf32>
    %cst_52 = arith.constant 0.000000e+00 : f32
    %190 = vector.broadcast %cst_52 : f32 to vector<8x128xf32>
    %c10 = arith.constant 10 : index
    %191 = arith.index_cast %2 : i32 to index
    %c0_53 = arith.constant 0 : index
    %192 = vector.load %arg1[%c10, %191, %c0_53] : memref<30x8x128xf32, #tpu.memory_space<vmem>>, vector<1x8x128xf32>
    %193 = vector.shape_cast %192 : vector<1x8x128xf32> to vector<8x128xf32>
    %c10_54 = arith.constant 10 : index
    %194 = arith.index_cast %2 : i32 to index
    %c0_55 = arith.constant 0 : index
    %195 = vector.load %arg2[%c10_54, %194, %c0_55] : memref<30x8x128xf32, #tpu.memory_space<vmem>>, vector<1x8x128xf32>
    %196 = vector.shape_cast %195 : vector<1x8x128xf32> to vector<8x128xf32>
    %197 = arith.subf %193, %196 : vector<8x128xf32>
    %198 = arith.mulf %197, %197 : vector<8x128xf32>
    %199 = arith.addf %190, %198 : vector<8x128xf32>
    %c11 = arith.constant 11 : index
    %200 = arith.index_cast %2 : i32 to index
    %c0_56 = arith.constant 0 : index
    %201 = vector.load %arg1[%c11, %200, %c0_56] : memref<30x8x128xf32, #tpu.memory_space<vmem>>, vector<1x8x128xf32>
    %202 = vector.shape_cast %201 : vector<1x8x128xf32> to vector<8x128xf32>
    %c11_57 = arith.constant 11 : index
    %203 = arith.index_cast %2 : i32 to index
    %c0_58 = arith.constant 0 : index
    %204 = vector.load %arg2[%c11_57, %203, %c0_58] : memref<30x8x128xf32, #tpu.memory_space<vmem>>, vector<1x8x128xf32>
    %205 = vector.shape_cast %204 : vector<1x8x128xf32> to vector<8x128xf32>
    %206 = arith.subf %202, %205 : vector<8x128xf32>
    %207 = arith.mulf %206, %206 : vector<8x128xf32>
    %208 = arith.addf %199, %207 : vector<8x128xf32>
    %c12 = arith.constant 12 : index
    %209 = arith.index_cast %2 : i32 to index
    %c0_59 = arith.constant 0 : index
    %210 = vector.load %arg1[%c12, %209, %c0_59] : memref<30x8x128xf32, #tpu.memory_space<vmem>>, vector<1x8x128xf32>
    %211 = vector.shape_cast %210 : vector<1x8x128xf32> to vector<8x128xf32>
    %c12_60 = arith.constant 12 : index
    %212 = arith.index_cast %2 : i32 to index
    %c0_61 = arith.constant 0 : index
    %213 = vector.load %arg2[%c12_60, %212, %c0_61] : memref<30x8x128xf32, #tpu.memory_space<vmem>>, vector<1x8x128xf32>
    %214 = vector.shape_cast %213 : vector<1x8x128xf32> to vector<8x128xf32>
    %215 = arith.subf %211, %214 : vector<8x128xf32>
    %216 = arith.mulf %215, %215 : vector<8x128xf32>
    %217 = arith.addf %208, %216 : vector<8x128xf32>
    %c13 = arith.constant 13 : index
    %218 = arith.index_cast %2 : i32 to index
    %c0_62 = arith.constant 0 : index
    %219 = vector.load %arg1[%c13, %218, %c0_62] : memref<30x8x128xf32, #tpu.memory_space<vmem>>, vector<1x8x128xf32>
    %220 = vector.shape_cast %219 : vector<1x8x128xf32> to vector<8x128xf32>
    %c13_63 = arith.constant 13 : index
    %221 = arith.index_cast %2 : i32 to index
    %c0_64 = arith.constant 0 : index
    %222 = vector.load %arg2[%c13_63, %221, %c0_64] : memref<30x8x128xf32, #tpu.memory_space<vmem>>, vector<1x8x128xf32>
    %223 = vector.shape_cast %222 : vector<1x8x128xf32> to vector<8x128xf32>
    %224 = arith.subf %220, %223 : vector<8x128xf32>
    %225 = arith.mulf %224, %224 : vector<8x128xf32>
    %226 = arith.addf %217, %225 : vector<8x128xf32>
    %c14 = arith.constant 14 : index
    %227 = arith.index_cast %2 : i32 to index
    %c0_65 = arith.constant 0 : index
    %228 = vector.load %arg1[%c14, %227, %c0_65] : memref<30x8x128xf32, #tpu.memory_space<vmem>>, vector<1x8x128xf32>
    %229 = vector.shape_cast %228 : vector<1x8x128xf32> to vector<8x128xf32>
    %c14_66 = arith.constant 14 : index
    %230 = arith.index_cast %2 : i32 to index
    %c0_67 = arith.constant 0 : index
    %231 = vector.load %arg2[%c14_66, %230, %c0_67] : memref<30x8x128xf32, #tpu.memory_space<vmem>>, vector<1x8x128xf32>
    %232 = vector.shape_cast %231 : vector<1x8x128xf32> to vector<8x128xf32>
    %233 = arith.subf %229, %232 : vector<8x128xf32>
    %234 = arith.mulf %233, %233 : vector<8x128xf32>
    %235 = arith.addf %226, %234 : vector<8x128xf32>
    %c15 = arith.constant 15 : index
    %236 = arith.index_cast %2 : i32 to index
    %c0_68 = arith.constant 0 : index
    %237 = vector.load %arg1[%c15, %236, %c0_68] : memref<30x8x128xf32, #tpu.memory_space<vmem>>, vector<1x8x128xf32>
    %238 = vector.shape_cast %237 : vector<1x8x128xf32> to vector<8x128xf32>
    %c15_69 = arith.constant 15 : index
    %239 = arith.index_cast %2 : i32 to index
    %c0_70 = arith.constant 0 : index
    %240 = vector.load %arg2[%c15_69, %239, %c0_70] : memref<30x8x128xf32, #tpu.memory_space<vmem>>, vector<1x8x128xf32>
    %241 = vector.shape_cast %240 : vector<1x8x128xf32> to vector<8x128xf32>
    %242 = arith.subf %238, %241 : vector<8x128xf32>
    %243 = arith.mulf %242, %242 : vector<8x128xf32>
    %244 = arith.addf %235, %243 : vector<8x128xf32>
    %c16 = arith.constant 16 : index
    %245 = arith.index_cast %2 : i32 to index
    %c0_71 = arith.constant 0 : index
    %246 = vector.load %arg1[%c16, %245, %c0_71] : memref<30x8x128xf32, #tpu.memory_space<vmem>>, vector<1x8x128xf32>
    %247 = vector.shape_cast %246 : vector<1x8x128xf32> to vector<8x128xf32>
    %c16_72 = arith.constant 16 : index
    %248 = arith.index_cast %2 : i32 to index
    %c0_73 = arith.constant 0 : index
    %249 = vector.load %arg2[%c16_72, %248, %c0_73] : memref<30x8x128xf32, #tpu.memory_space<vmem>>, vector<1x8x128xf32>
    %250 = vector.shape_cast %249 : vector<1x8x128xf32> to vector<8x128xf32>
    %251 = arith.subf %247, %250 : vector<8x128xf32>
    %252 = arith.mulf %251, %251 : vector<8x128xf32>
    %253 = arith.addf %244, %252 : vector<8x128xf32>
    %c17 = arith.constant 17 : index
    %254 = arith.index_cast %2 : i32 to index
    %c0_74 = arith.constant 0 : index
    %255 = vector.load %arg1[%c17, %254, %c0_74] : memref<30x8x128xf32, #tpu.memory_space<vmem>>, vector<1x8x128xf32>
    %256 = vector.shape_cast %255 : vector<1x8x128xf32> to vector<8x128xf32>
    %c17_75 = arith.constant 17 : index
    %257 = arith.index_cast %2 : i32 to index
    %c0_76 = arith.constant 0 : index
    %258 = vector.load %arg2[%c17_75, %257, %c0_76] : memref<30x8x128xf32, #tpu.memory_space<vmem>>, vector<1x8x128xf32>
    %259 = vector.shape_cast %258 : vector<1x8x128xf32> to vector<8x128xf32>
    %260 = arith.subf %256, %259 : vector<8x128xf32>
    %261 = arith.mulf %260, %260 : vector<8x128xf32>
    %262 = arith.addf %253, %261 : vector<8x128xf32>
    %c18 = arith.constant 18 : index
    %263 = arith.index_cast %2 : i32 to index
    %c0_77 = arith.constant 0 : index
    %264 = vector.load %arg1[%c18, %263, %c0_77] : memref<30x8x128xf32, #tpu.memory_space<vmem>>, vector<1x8x128xf32>
    %265 = vector.shape_cast %264 : vector<1x8x128xf32> to vector<8x128xf32>
    %c18_78 = arith.constant 18 : index
    %266 = arith.index_cast %2 : i32 to index
    %c0_79 = arith.constant 0 : index
    %267 = vector.load %arg2[%c18_78, %266, %c0_79] : memref<30x8x128xf32, #tpu.memory_space<vmem>>, vector<1x8x128xf32>
    %268 = vector.shape_cast %267 : vector<1x8x128xf32> to vector<8x128xf32>
    %269 = arith.subf %265, %268 : vector<8x128xf32>
    %270 = arith.mulf %269, %269 : vector<8x128xf32>
    %271 = arith.addf %262, %270 : vector<8x128xf32>
    %c19 = arith.constant 19 : index
    %272 = arith.index_cast %2 : i32 to index
    %c0_80 = arith.constant 0 : index
    %273 = vector.load %arg1[%c19, %272, %c0_80] : memref<30x8x128xf32, #tpu.memory_space<vmem>>, vector<1x8x128xf32>
    %274 = vector.shape_cast %273 : vector<1x8x128xf32> to vector<8x128xf32>
    %c19_81 = arith.constant 19 : index
    %275 = arith.index_cast %2 : i32 to index
    %c0_82 = arith.constant 0 : index
    %276 = vector.load %arg2[%c19_81, %275, %c0_82] : memref<30x8x128xf32, #tpu.memory_space<vmem>>, vector<1x8x128xf32>
    %277 = vector.shape_cast %276 : vector<1x8x128xf32> to vector<8x128xf32>
    %278 = arith.subf %274, %277 : vector<8x128xf32>
    %279 = arith.mulf %278, %278 : vector<8x128xf32>
    %280 = arith.addf %271, %279 : vector<8x128xf32>
    %c20 = arith.constant 20 : index
    %281 = arith.index_cast %2 : i32 to index
    %c0_83 = arith.constant 0 : index
    %282 = vector.load %arg1[%c20, %281, %c0_83] : memref<30x8x128xf32, #tpu.memory_space<vmem>>, vector<1x8x128xf32>
    %283 = vector.shape_cast %282 : vector<1x8x128xf32> to vector<8x128xf32>
    %c20_84 = arith.constant 20 : index
    %284 = arith.index_cast %2 : i32 to index
    %c0_85 = arith.constant 0 : index
    %285 = vector.load %arg2[%c20_84, %284, %c0_85] : memref<30x8x128xf32, #tpu.memory_space<vmem>>, vector<1x8x128xf32>
    %286 = vector.shape_cast %285 : vector<1x8x128xf32> to vector<8x128xf32>
    %287 = arith.subf %283, %286 : vector<8x128xf32>
    %288 = arith.mulf %287, %287 : vector<8x128xf32>
    %289 = arith.addf %280, %288 : vector<8x128xf32>
    %c21 = arith.constant 21 : index
    %290 = arith.index_cast %2 : i32 to index
    %c0_86 = arith.constant 0 : index
    %291 = vector.load %arg1[%c21, %290, %c0_86] : memref<30x8x128xf32, #tpu.memory_space<vmem>>, vector<1x8x128xf32>
    %292 = vector.shape_cast %291 : vector<1x8x128xf32> to vector<8x128xf32>
    %c21_87 = arith.constant 21 : index
    %293 = arith.index_cast %2 : i32 to index
    %c0_88 = arith.constant 0 : index
    %294 = vector.load %arg2[%c21_87, %293, %c0_88] : memref<30x8x128xf32, #tpu.memory_space<vmem>>, vector<1x8x128xf32>
    %295 = vector.shape_cast %294 : vector<1x8x128xf32> to vector<8x128xf32>
    %296 = arith.subf %292, %295 : vector<8x128xf32>
    %297 = arith.mulf %296, %296 : vector<8x128xf32>
    %298 = arith.addf %289, %297 : vector<8x128xf32>
    %c22 = arith.constant 22 : index
    %299 = arith.index_cast %2 : i32 to index
    %c0_89 = arith.constant 0 : index
    %300 = vector.load %arg1[%c22, %299, %c0_89] : memref<30x8x128xf32, #tpu.memory_space<vmem>>, vector<1x8x128xf32>
    %301 = vector.shape_cast %300 : vector<1x8x128xf32> to vector<8x128xf32>
    %c22_90 = arith.constant 22 : index
    %302 = arith.index_cast %2 : i32 to index
    %c0_91 = arith.constant 0 : index
    %303 = vector.load %arg2[%c22_90, %302, %c0_91] : memref<30x8x128xf32, #tpu.memory_space<vmem>>, vector<1x8x128xf32>
    %304 = vector.shape_cast %303 : vector<1x8x128xf32> to vector<8x128xf32>
    %305 = arith.subf %301, %304 : vector<8x128xf32>
    %306 = arith.mulf %305, %305 : vector<8x128xf32>
    %307 = arith.addf %298, %306 : vector<8x128xf32>
    %c23 = arith.constant 23 : index
    %308 = arith.index_cast %2 : i32 to index
    %c0_92 = arith.constant 0 : index
    %309 = vector.load %arg1[%c23, %308, %c0_92] : memref<30x8x128xf32, #tpu.memory_space<vmem>>, vector<1x8x128xf32>
    %310 = vector.shape_cast %309 : vector<1x8x128xf32> to vector<8x128xf32>
    %c23_93 = arith.constant 23 : index
    %311 = arith.index_cast %2 : i32 to index
    %c0_94 = arith.constant 0 : index
    %312 = vector.load %arg2[%c23_93, %311, %c0_94] : memref<30x8x128xf32, #tpu.memory_space<vmem>>, vector<1x8x128xf32>
    %313 = vector.shape_cast %312 : vector<1x8x128xf32> to vector<8x128xf32>
    %314 = arith.subf %310, %313 : vector<8x128xf32>
    %315 = arith.mulf %314, %314 : vector<8x128xf32>
    %316 = arith.addf %307, %315 : vector<8x128xf32>
    %c24 = arith.constant 24 : index
    %317 = arith.index_cast %2 : i32 to index
    %c0_95 = arith.constant 0 : index
    %318 = vector.load %arg1[%c24, %317, %c0_95] : memref<30x8x128xf32, #tpu.memory_space<vmem>>, vector<1x8x128xf32>
    %319 = vector.shape_cast %318 : vector<1x8x128xf32> to vector<8x128xf32>
    %c24_96 = arith.constant 24 : index
    %320 = arith.index_cast %2 : i32 to index
    %c0_97 = arith.constant 0 : index
    %321 = vector.load %arg2[%c24_96, %320, %c0_97] : memref<30x8x128xf32, #tpu.memory_space<vmem>>, vector<1x8x128xf32>
    %322 = vector.shape_cast %321 : vector<1x8x128xf32> to vector<8x128xf32>
    %323 = arith.subf %319, %322 : vector<8x128xf32>
    %324 = arith.mulf %323, %323 : vector<8x128xf32>
    %325 = arith.addf %316, %324 : vector<8x128xf32>
    %c25 = arith.constant 25 : index
    %326 = arith.index_cast %2 : i32 to index
    %c0_98 = arith.constant 0 : index
    %327 = vector.load %arg1[%c25, %326, %c0_98] : memref<30x8x128xf32, #tpu.memory_space<vmem>>, vector<1x8x128xf32>
    %328 = vector.shape_cast %327 : vector<1x8x128xf32> to vector<8x128xf32>
    %c25_99 = arith.constant 25 : index
    %329 = arith.index_cast %2 : i32 to index
    %c0_100 = arith.constant 0 : index
    %330 = vector.load %arg2[%c25_99, %329, %c0_100] : memref<30x8x128xf32, #tpu.memory_space<vmem>>, vector<1x8x128xf32>
    %331 = vector.shape_cast %330 : vector<1x8x128xf32> to vector<8x128xf32>
    %332 = arith.subf %328, %331 : vector<8x128xf32>
    %333 = arith.mulf %332, %332 : vector<8x128xf32>
    %334 = arith.addf %325, %333 : vector<8x128xf32>
    %c26 = arith.constant 26 : index
    %335 = arith.index_cast %2 : i32 to index
    %c0_101 = arith.constant 0 : index
    %336 = vector.load %arg1[%c26, %335, %c0_101] : memref<30x8x128xf32, #tpu.memory_space<vmem>>, vector<1x8x128xf32>
    %337 = vector.shape_cast %336 : vector<1x8x128xf32> to vector<8x128xf32>
    %c26_102 = arith.constant 26 : index
    %338 = arith.index_cast %2 : i32 to index
    %c0_103 = arith.constant 0 : index
    %339 = vector.load %arg2[%c26_102, %338, %c0_103] : memref<30x8x128xf32, #tpu.memory_space<vmem>>, vector<1x8x128xf32>
    %340 = vector.shape_cast %339 : vector<1x8x128xf32> to vector<8x128xf32>
    %341 = arith.subf %337, %340 : vector<8x128xf32>
    %342 = arith.mulf %341, %341 : vector<8x128xf32>
    %343 = arith.addf %334, %342 : vector<8x128xf32>
    %c27 = arith.constant 27 : index
    %344 = arith.index_cast %2 : i32 to index
    %c0_104 = arith.constant 0 : index
    %345 = vector.load %arg1[%c27, %344, %c0_104] : memref<30x8x128xf32, #tpu.memory_space<vmem>>, vector<1x8x128xf32>
    %346 = vector.shape_cast %345 : vector<1x8x128xf32> to vector<8x128xf32>
    %c27_105 = arith.constant 27 : index
    %347 = arith.index_cast %2 : i32 to index
    %c0_106 = arith.constant 0 : index
    %348 = vector.load %arg2[%c27_105, %347, %c0_106] : memref<30x8x128xf32, #tpu.memory_space<vmem>>, vector<1x8x128xf32>
    %349 = vector.shape_cast %348 : vector<1x8x128xf32> to vector<8x128xf32>
    %350 = arith.subf %346, %349 : vector<8x128xf32>
    %351 = arith.mulf %350, %350 : vector<8x128xf32>
    %352 = arith.addf %343, %351 : vector<8x128xf32>
    %c28 = arith.constant 28 : index
    %353 = arith.index_cast %2 : i32 to index
    %c0_107 = arith.constant 0 : index
    %354 = vector.load %arg1[%c28, %353, %c0_107] : memref<30x8x128xf32, #tpu.memory_space<vmem>>, vector<1x8x128xf32>
    %355 = vector.shape_cast %354 : vector<1x8x128xf32> to vector<8x128xf32>
    %c28_108 = arith.constant 28 : index
    %356 = arith.index_cast %2 : i32 to index
    %c0_109 = arith.constant 0 : index
    %357 = vector.load %arg2[%c28_108, %356, %c0_109] : memref<30x8x128xf32, #tpu.memory_space<vmem>>, vector<1x8x128xf32>
    %358 = vector.shape_cast %357 : vector<1x8x128xf32> to vector<8x128xf32>
    %359 = arith.subf %355, %358 : vector<8x128xf32>
    %360 = arith.mulf %359, %359 : vector<8x128xf32>
    %361 = arith.addf %352, %360 : vector<8x128xf32>
    %c29 = arith.constant 29 : index
    %362 = arith.index_cast %2 : i32 to index
    %c0_110 = arith.constant 0 : index
    %363 = vector.load %arg1[%c29, %362, %c0_110] : memref<30x8x128xf32, #tpu.memory_space<vmem>>, vector<1x8x128xf32>
    %364 = vector.shape_cast %363 : vector<1x8x128xf32> to vector<8x128xf32>
    %c29_111 = arith.constant 29 : index
    %365 = arith.index_cast %2 : i32 to index
    %c0_112 = arith.constant 0 : index
    %366 = vector.load %arg2[%c29_111, %365, %c0_112] : memref<30x8x128xf32, #tpu.memory_space<vmem>>, vector<1x8x128xf32>
    %367 = vector.shape_cast %366 : vector<1x8x128xf32> to vector<8x128xf32>
    %368 = arith.subf %364, %367 : vector<8x128xf32>
    %369 = arith.mulf %368, %368 : vector<8x128xf32>
    %370 = arith.addf %361, %369 : vector<8x128xf32>
    %371 = arith.addf %165, %182 : vector<8x128xf32>
    %cst_113 = arith.constant 5.000000e+00 : f32
    %372 = vector.broadcast %cst_113 : f32 to vector<8x128xf32>
    %373 = arith.mulf %372, %371 : vector<8x128xf32>
    %374 = arith.addf %373, %184 : vector<8x128xf32>
    %375 = arith.addf %374, %370 : vector<8x128xf32>
    %376 = arith.mulf %9, %375 : vector<8x128xf32>
    %cst_114 = arith.constant 5.000000e-01 : f32
    %377 = vector.broadcast %cst_114 : f32 to vector<8x128xf32>
    %378 = arith.mulf %377, %13 : vector<8x128xf32>
    %379 = arith.mulf %378, %189 : vector<8x128xf32>
    %380 = arith.addf %376, %379 : vector<8x128xf32>
    %381 = arith.addf %0, %380 : vector<8x128xf32>
    %c1_i32 = arith.constant 1 : i32
    %cst_115 = arith.constant 5.000000e-01 : f32
    %382 = vector.broadcast %cst_115 : f32 to vector<8x128xf32>
    %383 = arith.mulf %381, %382 : vector<8x128xf32>
    %c0_116 = arith.constant 0 : index
    %c0_117 = arith.constant 0 : index
    %c0_118 = arith.constant 0 : index
    %384 = vector.load %arg3[%c0_116, %c0_117, %c0_118] : memref<1x8x128xf32, #tpu.memory_space<vmem>>, vector<1x8x128xf32>
    %385 = vector.shape_cast %384 : vector<1x8x128xf32> to vector<8x128xf32>
    %386 = vector.shape_cast %383 : vector<8x128xf32> to vector<1x8x128xf32>
    tpu.vector_store %arg3[%c0_116, %c0_117, %c0_118], %386 {strides = array<i32>} : memref<1x8x128xf32, #tpu.memory_space<vmem>>, vector<1x8x128xf32>,
    return
  }
  func.func @transform_0(%arg0: i32) -> (i32, i32, i32) {
    %c0_i32 = arith.constant 0 : i32
    %c0_i32_0 = arith.constant 0 : i32
    %c0_i32_1 = arith.constant 0 : i32
    return %c0_i32, %arg0, %c0_i32_0 : i32, i32, i32
  }
  func.func @transform_1(%arg0: i32) -> (i32, i32, i32) {
    %c0_i32 = arith.constant 0 : i32
    %c0_i32_0 = arith.constant 0 : i32
    %c0_i32_1 = arith.constant 0 : i32
    return %c0_i32, %arg0, %c0_i32_0 : i32, i32, i32
  }
  func.func @transform_2(%arg0: i32) -> (i32, i32, i32) {
    %c0_i32 = arith.constant 0 : i32
    %c0_i32_0 = arith.constant 0 : i32
    %c0_i32_1 = arith.constant 0 : i32
    return %arg0, %c0_i32, %c0_i32_0 : i32, i32, i32
  }
}

</mosaic_0001>

<llo_original>
// kernel: yolo_loss_pallas.1
$region0: #{yolo_loss_pallas.1}
  #allocation0 [shape = 'u32[]', space=smem, size = 0x4, offset = 0x4, fixed_abs, tag = 'smem constant byte address 0x4 - core index']
  #allocation1 [shape = 'u32[144,128]{1,0:T(1,128)}', space=vmem, size = 0x12000, scoped, tag = 'internal scratch']
  %s0 = inlined_call_operand.vmem [shape: f32[30,8,128], index: 0, kind: input, shape index: {}]
  %s1 = inlined_call_operand.vmem [shape: f32[30,8,128], index: 1, kind: input, shape index: {}]
  %s2 = inlined_call_operand.vmem [shape: f32[1,8,128], index: 2, kind: output, shape index: {}]
  %s3 = sld [smem:[#allocation0]]
  $region18: #{yolo_loss_pallas.1} parent=0
    _
  %s5 = ssub.s32 1, %s3
  %s6 = scalar_select 0, %s5, %s3
  // Predicated region
  $region2: #{yolo_loss_pallas.1} parent=0 // pred_check
    _
  $region3: #{yolo_loss_pallas.1} parent=0 // pred_check_branch
    %8 = sbr.rel (0) target = $region5
  $region4: #{yolo_loss_pallas.1} parent=0 // pred_region
    _
  $region5: #{yolo_loss_pallas.1} parent=0 // pred_fallthru
    _
  // Predicated region
  $region6: #{yolo_loss_pallas.1} parent=0 // pred_check
    _
  $region7: #{yolo_loss_pallas.1} parent=0 // pred_check_branch
    %10 = sbr.rel (0) target = $region9
  $region8: #{yolo_loss_pallas.1} parent=0 // pred_region
    _
  $region9: #{yolo_loss_pallas.1} parent=0 // pred_fallthru
    _
  %s11 = sadd.s32 0, 32
  %s12 = scalar_lea.vmem %s1, %s11
  %v13 = vld [vmem:[%s12] sm:$0xff]
  %vm14 = vcmp.gt.f32.partialorder %v13, 0.0
  %v15 = vsel %vm14, 1, 0
  %v16 = vcvt.s32.f32 %v15
  %vm17 = vcmp.eq.f32.partialorder %v13, 0.0
  %v18 = vsel %vm17, 1, 0
  %v19 = vcvt.s32.f32 %v18
  %v20 = vld [vmem:[%s0] sm:$0xff]
  %s21 = sadd.s32 0, 8
  %s22 = scalar_lea.vmem %s0, %s21
  %v23 = vld [vmem:[%s22] sm:$0xff]
  %s24 = sadd.s32 0, 16
  %s25 = scalar_lea.vmem %s0, %s24
  %v26 = vld [vmem:[%s25] sm:$0xff]
  %s27 = sadd.s32 0, 24
  %s28 = scalar_lea.vmem %s0, %s27
  %v29 = vld [vmem:[%s28] sm:$0xff]
  %s30 = scalar_lea.vmem %s0, %s11
  %v31 = vld [vmem:[%s30] sm:$0xff]
  %s32 = sadd.s32 0, 40
  %s33 = scalar_lea.vmem %s0, %s32
  %v34 = vld [vmem:[%s33] sm:$0xff]
  %s35 = sadd.s32 0, 48
  %s36 = scalar_lea.vmem %s0, %s35
  %v37 = vld [vmem:[%s36] sm:$0xff]
  %s38 = sadd.s32 0, 56
  %s39 = scalar_lea.vmem %s0, %s38
  %v40 = vld [vmem:[%s39] sm:$0xff]
  %s41 = sadd.s32 0, 64
  %s42 = scalar_lea.vmem %s0, %s41
  %v43 = vld [vmem:[%s42] sm:$0xff]
  %s44 = sadd.s32 0, 72
  %s45 = scalar_lea.vmem %s0, %s44
  %v46 = vld [vmem:[%s45] sm:$0xff]
  %v47 = vld [vmem:[%s1] sm:$0xff]
  %s48 = scalar_lea.vmem %s1, %s21
  %v49 = vld [vmem:[%s48] sm:$0xff]
  %s50 = scalar_lea.vmem %s1, %s24
  %v51 = vld [vmem:[%s50] sm:$0xff]
  %s52 = scalar_lea.vmem %s1, %s27
  %v53 = vld [vmem:[%s52] sm:$0xff]
  %s54 = scalar_lea.vmem %s1, %s32
  %v55 = vld [vmem:[%s54] sm:$0xff]
  %s56 = scalar_lea.vmem %s1, %s35
  %v57 = vld [vmem:[%s56] sm:$0xff]
  %s58 = scalar_lea.vmem %s1, %s38
  %v59 = vld [vmem:[%s58] sm:$0xff]
  %s60 = scalar_lea.vmem %s1, %s41
  %v61 = vld [vmem:[%s60] sm:$0xff]
  %s62 = scalar_lea.vmem %s1, %s44
  %v63 = vld [vmem:[%s62] sm:$0xff]
  %v64 = vmul.f32 %v26, 0.5
  %v65 = vsub.f32 %v20, %v64
  %v66 = vmul.f32 %v51, 0.5
  %v67 = vsub.f32 %v47, %v66
  %v68 = vmax.f32 %v65, %v67
  %v69 = vmul.f32 %v29, 0.5
  %v70 = vsub.f32 %v23, %v69
  %v71 = vmul.f32 %v53, 0.5
  %v72 = vsub.f32 %v49, %v71
  %v73 = vmax.f32 %v70, %v72
  %v74 = vadd.f32 %v20, %v64
  %v75 = vadd.f32 %v47, %v66
  %v76 = vmin.f32 %v74, %v75
  %v77 = vadd.f32 %v23, %v69
  %v78 = vadd.f32 %v49, %v71
  %v79 = vmin.f32 %v77, %v78
  %vm80 = vcmp.lt.f32.partialorder %v76, %v68
  %vm81 = vcmp.lt.f32.partialorder %v79, %v73
  %vm82 = vmor %vm80, %vm81
  %v83 = vsel %vm82, 1, 0
  %v84 = vcvt.s32.f32 %v83
  %v85 = vsub.f32 %v76, %v68
  %v86 = vmul.f32 %v84, %v85
  %v87 = vsub.f32 %v79, %v73
  %v88 = vmul.f32 %v86, %v87
  %v89 = vmul.f32 %v26, %v29
  %v90 = vmul.f32 %v51, %v53
  %v91 = vadd.f32 %v89, %v90
  %v92 = vsub.f32 %v91, %v88
  %v93 = vrcp.pop %v92
  %v94 = vmul.f32 %v88, %v93
  %v95 = vmul.f32 %v40, 0.5
  %v96 = vsub.f32 %v34, %v95
  %v97 = vmul.f32 %v59, 0.5
  %v98 = vsub.f32 %v55, %v97
  %v99 = vmax.f32 %v96, %v98
  %v100 = vmul.f32 %v43, 0.5
  %v101 = vsub.f32 %v37, %v100
  %v102 = vmul.f32 %v61, 0.5
  %v103 = vsub.f32 %v57, %v102
  %v104 = vmax.f32 %v101, %v103
  %v105 = vadd.f32 %v34, %v95
  %v106 = vadd.f32 %v55, %v97
  %v107 = vmin.f32 %v105, %v106
  %v108 = vadd.f32 %v37, %v100
  %v109 = vadd.f32 %v57, %v102
  %v110 = vmin.f32 %v108, %v109
  %vm111 = vcmp.lt.f32.partialorder %v107, %v99
  %vm112 = vcmp.lt.f32.partialorder %v110, %v104
  %vm113 = vmor %vm111, %vm112
  %v114 = vsel %vm113, 1, 0
  %v115 = vcvt.s32.f32 %v114
  %v116 = vsub.f32 %v107, %v99
  %v117 = vmul.f32 %v115, %v116
  %v118 = vsub.f32 %v110, %v104
  %v119 = vmul.f32 %v117, %v118
  %v120 = vmul.f32 %v40, %v43
  %v121 = vmul.f32 %v59, %v61
  %v122 = vadd.f32 %v120, %v121
  %v123 = vsub.f32 %v122, %v119
  %v124 = vrcp.pop %v123
  %v125 = vmul.f32 %v119, %v124
  %vm126 = vcmp.gt.f32.partialorder %v94, %v125
  %v127 = vsel %vm126, %v20, %v34
  %v128 = vsel %vm126, %v23, %v37
  %v129 = vsel %vm126, %v26, %v40
  %v130 = vsel %vm126, %v29, %v43
  %v131 = vsel %vm126, %v31, %v46
  %v132 = vsub.f32 %v127, %v47
  %v133 = vmul.f32 %v132, %v132
  %v134 = vsub.f32 %v128, %v49
  %v135 = vmul.f32 %v134, %v134
  %v136 = vadd.f32 %v133, %v135
  %v137 = vsel %vm14, %v129, 1.0
  %v138 = vrsqrt.pop %v137
  %v139 = vmul.f32 %v137, %v138
  %vm140 = vcmp.eq.f32.partialorder %v137, inf
  %v141 = vsel %vm140, %v137, %v139
  %vm142 = vcmp.eq.f32.partialorder %v137, 0.0
  %v143 = vand.u32 %v137, 2147483648
  %v144 = vsel %vm142, %v143, %v141
  %v145 = vsel %vm14, %v130, 1.0
  %v146 = vrsqrt.pop %v145
  %v147 = vmul.f32 %v145, %v146
  %vm148 = vcmp.eq.f32.partialorder %v145, inf
  %v149 = vsel %vm148, %v145, %v147
  %vm150 = vcmp.eq.f32.partialorder %v145, 0.0
  %v151 = vand.u32 %v145, 2147483648
  %v152 = vsel %vm150, %v151, %v149
  %v153 = vsel %vm14, %v51, 1.0
  %v154 = vrsqrt.pop %v153
  %v155 = vmul.f32 %v153, %v154
  %vm156 = vcmp.eq.f32.partialorder %v153, inf
  %v157 = vsel %vm156, %v153, %v155
  %vm158 = vcmp.eq.f32.partialorder %v153, 0.0
  %v159 = vand.u32 %v153, 2147483648
  %v160 = vsel %vm158, %v159, %v157
  %v161 = vsel %vm14, %v53, 1.0
  %v162 = vrsqrt.pop %v161
  %v163 = vmul.f32 %v161, %v162
  %vm164 = vcmp.eq.f32.partialorder %v161, inf
  %v165 = vsel %vm164, %v161, %v163
  %vm166 = vcmp.eq.f32.partialorder %v161, 0.0
  %v167 = vand.u32 %v161, 2147483648
  %v168 = vsel %vm166, %v167, %v165
  %v169 = vsub.f32 %v144, %v160
  %v170 = vmul.f32 %v169, %v169
  %v171 = vsub.f32 %v152, %v168
  %v172 = vmul.f32 %v171, %v171
  %v173 = vadd.f32 %v170, %v172
  %v174 = vsub.f32 %v131, %v13
  %v175 = vmul.f32 %v174, %v174
  %v176 = vsub.f32 %v31, %v13
  %v177 = vmul.f32 %v176, %v176
  %v178 = vsub.f32 %v46, %v63
  %v179 = vmul.f32 %v178, %v178
  %v180 = vadd.f32 %v177, %v179
  %s181 = sadd.s32 0, 80
  %s182 = scalar_lea.vmem %s0, %s181
  %v183 = vld [vmem:[%s182] sm:$0xff]
  %s184 = scalar_lea.vmem %s1, %s181
  %v185 = vld [vmem:[%s184] sm:$0xff]
  %v186 = vsub.f32 %v183, %v185
  %v187 = vmul.f32 %v186, %v186
  %v188 = vadd.f32 %v187, 0.0
  %s189 = sadd.s32 0, 88
  %s190 = scalar_lea.vmem %s0, %s189
  %v191 = vld [vmem:[%s190] sm:$0xff]
  %s192 = scalar_lea.vmem %s1, %s189
  %v193 = vld [vmem:[%s192] sm:$0xff]
  %v194 = vsub.f32 %v191, %v193
  %v195 = vmul.f32 %v194, %v194
  %v196 = vadd.f32 %v188, %v195
  %s197 = sadd.s32 0, 96
  %s198 = scalar_lea.vmem %s0, %s197
  %v199 = vld [vmem:[%s198] sm:$0xff]
  %s200 = scalar_lea.vmem %s1, %s197
  %v201 = vld [vmem:[%s200] sm:$0xff]
  %v202 = vsub.f32 %v199, %v201
  %v203 = vmul.f32 %v202, %v202
  %v204 = vadd.f32 %v196, %v203
  %s205 = sadd.s32 0, 104
  %s206 = scalar_lea.vmem %s0, %s205
  %v207 = vld [vmem:[%s206] sm:$0xff]
  %s208 = scalar_lea.vmem %s1, %s205
  %v209 = vld [vmem:[%s208] sm:$0xff]
  %v210 = vsub.f32 %v207, %v209
  %v211 = vmul.f32 %v210, %v210
  %v212 = vadd.f32 %v204, %v211
  %s213 = sadd.s32 0, 112
  %s214 = scalar_lea.vmem %s0, %s213
  %v215 = vld [vmem:[%s214] sm:$0xff]
  %s216 = scalar_lea.vmem %s1, %s213
  %v217 = vld [vmem:[%s216] sm:$0xff]
  %v218 = vsub.f32 %v215, %v217
  %v219 = vmul.f32 %v218, %v218
  %v220 = vadd.f32 %v212, %v219
  %s221 = sadd.s32 0, 120
  %s222 = scalar_lea.vmem %s0, %s221
  %v223 = vld [vmem:[%s222] sm:$0xff]
  %s224 = scalar_lea.vmem %s1, %s221
  %v225 = vld [vmem:[%s224] sm:$0xff]
  %v226 = vsub.f32 %v223, %v225
  %v227 = vmul.f32 %v226, %v226
  %v228 = vadd.f32 %v220, %v227
  %s229 = sadd.s32 0, 128
  %s230 = scalar_lea.vmem %s0, %s229
  %v231 = vld [vmem:[%s230] sm:$0xff]
  %s232 = scalar_lea.vmem %s1, %s229
  %v233 = vld [vmem:[%s232] sm:$0xff]
  %v234 = vsub.f32 %v231, %v233
  %v235 = vmul.f32 %v234, %v234
  %v236 = vadd.f32 %v228, %v235
  %s237 = sadd.s32 0, 136
  %s238 = scalar_lea.vmem %s0, %s237
  %v239 = vld [vmem:[%s238] sm:$0xff]
  %s240 = scalar_lea.vmem %s1, %s237
  %v241 = vld [vmem:[%s240] sm:$0xff]
  %v242 = vsub.f32 %v239, %v241
  %v243 = vmul.f32 %v242, %v242
  %v244 = vadd.f32 %v236, %v243
  %s245 = sadd.s32 0, 144
  %s246 = scalar_lea.vmem %s0, %s245
  %v247 = vld [vmem:[%s246] sm:$0xff]
  %s248 = scalar_lea.vmem %s1, %s245
  %v249 = vld [vmem:[%s248] sm:$0xff]
  %v250 = vsub.f32 %v247, %v249
  %v251 = vmul.f32 %v250, %v250
  %v252 = vadd.f32 %v244, %v251
  %s253 = sadd.s32 0, 152
  %s254 = scalar_lea.vmem %s0, %s253
  %v255 = vld [vmem:[%s254] sm:$0xff]
  %s256 = scalar_lea.vmem %s1, %s253
  %v257 = vld [vmem:[%s256] sm:$0xff]
  %v258 = vsub.f32 %v255, %v257
  %v259 = vmul.f32 %v258, %v258
  %v260 = vadd.f32 %v252, %v259
  %s261 = sadd.s32 0, 160
  %s262 = scalar_lea.vmem %s0, %s261
  %v263 = vld [vmem:[%s262] sm:$0xff]
  %s264 = scalar_lea.vmem %s1, %s261
  %v265 = vld [vmem:[%s264] sm:$0xff]
  %v266 = vsub.f32 %v263, %v265
  %v267 = vmul.f32 %v266, %v266
  %v268 = vadd.f32 %v260, %v267
  %s269 = sadd.s32 0, 168
  %s270 = scalar_lea.vmem %s0, %s269
  %v271 = vld [vmem:[%s270] sm:$0xff]
  %s272 = scalar_lea.vmem %s1, %s269
  %v273 = vld [vmem:[%s272] sm:$0xff]
  %v274 = vsub.f32 %v271, %v273
  %v275 = vmul.f32 %v274, %v274
  %v276 = vadd.f32 %v268, %v275
  %s277 = sadd.s32 0, 176
  %s278 = scalar_lea.vmem %s0, %s277
  %v279 = vld [vmem:[%s278] sm:$0xff]
  %s280 = scalar_lea.vmem %s1, %s277
  %v281 = vld [vmem:[%s280] sm:$0xff]
  %v282 = vsub.f32 %v279, %v281
  %v283 = vmul.f32 %v282, %v282
  %v284 = vadd.f32 %v276, %v283
  %s285 = sadd.s32 0, 184
  %s286 = scalar_lea.vmem %s0, %s285
  %v287 = vld [vmem:[%s286] sm:$0xff]
  %s288 = scalar_lea.vmem %s1, %s285
  %v289 = vld [vmem:[%s288] sm:$0xff]
  %v290 = vsub.f32 %v287, %v289
  %v291 = vmul.f32 %v290, %v290
  %v292 = vadd.f32 %v284, %v291
  %s293 = sadd.s32 0, 192
  %s294 = scalar_lea.vmem %s0, %s293
  %v295 = vld [vmem:[%s294] sm:$0xff]
  %s296 = scalar_lea.vmem %s1, %s293
  %v297 = vld [vmem:[%s296] sm:$0xff]
  %v298 = vsub.f32 %v295, %v297
  %v299 = vmul.f32 %v298, %v298
  %v300 = vadd.f32 %v292, %v299
  %s301 = sadd.s32 0, 200
  %s302 = scalar_lea.vmem %s0, %s301
  %v303 = vld [vmem:[%s302] sm:$0xff]
  %s304 = scalar_lea.vmem %s1, %s301
  %v305 = vld [vmem:[%s304] sm:$0xff]
  %v306 = vsub.f32 %v303, %v305
  %v307 = vmul.f32 %v306, %v306
  %v308 = vadd.f32 %v300, %v307
  %s309 = sadd.s32 0, 208
  %s310 = scalar_lea.vmem %s0, %s309
  %v311 = vld [vmem:[%s310] sm:$0xff]
  %s312 = scalar_lea.vmem %s1, %s309
  %v313 = vld [vmem:[%s312] sm:$0xff]
  %v314 = vsub.f32 %v311, %v313
  %v315 = vmul.f32 %v314, %v314
  %v316 = vadd.f32 %v308, %v315
  %s317 = sadd.s32 0, 216
  %s318 = scalar_lea.vmem %s0, %s317
  %v319 = vld [vmem:[%s318] sm:$0xff]
  %s320 = scalar_lea.vmem %s1, %s317
  %v321 = vld [vmem:[%s320] sm:$0xff]
  %v322 = vsub.f32 %v319, %v321
  %v323 = vmul.f32 %v322, %v322
  %v324 = vadd.f32 %v316, %v323
  %s325 = sadd.s32 0, 224
  %s326 = scalar_lea.vmem %s0, %s325
  %v327 = vld [vmem:[%s326] sm:$0xff]
  %s328 = scalar_lea.vmem %s1, %s325
  %v329 = vld [vmem:[%s328] sm:$0xff]
  %v330 = vsub.f32 %v327, %v329
  %v331 = vmul.f32 %v330, %v330
  %v332 = vadd.f32 %v324, %v331
  %s333 = sadd.s32 0, 232
  %s334 = scalar_lea.vmem %s0, %s333
  %v335 = vld [vmem:[%s334] sm:$0xff]
  %s336 = scalar_lea.vmem %s1, %s333
  %v337 = vld [vmem:[%s336] sm:$0xff]
  %v338 = vsub.f32 %v335, %v337
  %v339 = vmul.f32 %v338, %v338
  %v340 = vadd.f32 %v332, %v339
  %v341 = vadd.f32 %v136, %v173
  %v342 = vmul.f32 %v341, 5.0
  %v343 = vadd.f32 %v342, %v175
  %v344 = vadd.f32 %v343, %v340
  %v345 = vmul.f32 %v16, %v344
  %v346 = vmul.f32 %v19, 0.5
  %v347 = vmul.f32 %v346, %v180
  %v348 = vadd.f32 %v345, %v347
  %v349 = vadd.f32 %v348, 0.0
  %v350 = vmul.f32 %v349, 0.5
  %351 = vst [vmem:[%s2] sm:$0xff] %v350
  // Predicated region
  $region10: #{yolo_loss_pallas.1} parent=0 // pred_check
    _
  $region11: #{yolo_loss_pallas.1} parent=0 // pred_check_branch
    %353 = sbr.rel (0) target = $region13
  $region12: #{yolo_loss_pallas.1} parent=0 // pred_region
    _
  $region13: #{yolo_loss_pallas.1} parent=0 // pred_fallthru
    _
  // Predicated region
  $region14: #{yolo_loss_pallas.1} parent=0 // pred_check
    _
  $region15: #{yolo_loss_pallas.1} parent=0 // pred_check_branch
    %355 = sbr.rel (0) target = $region17
  $region16: #{yolo_loss_pallas.1} parent=0 // pred_region
    _
  $region17: #{yolo_loss_pallas.1} parent=0 // pred_fallthru
    _

</llo_original>
